<compile_context>
chip_gen: v7x
topology: tpu7x:2x2x1
jax: 0.10.0
libtpu: 0.0.40
codegen_flags: <defaults>
</compile_context>

<pallas_src>
import functools

import jax
import jax.numpy as jnp
from jax.experimental import pallas as pl
from jax.experimental.pallas import tpu as pltpu


def mamba_block_kernel(
    x_ref,        # (TM, D)     input rows (whole batch elements per tile)
    ln_g_ref,     # (1, D)      LayerNorm weight
    ln_b_ref,     # (1, D)      LayerNorm bias
    w_in_ref,     # (D, 2D)     fused in_proj weight, (in, out): [:, :D]=x, [:, D:]=gate
    b_in_ref,     # (1, 2D)
    w_conv_ref,   # (3D, D)     conv taps stacked along K: [x_prev | x_cur | x_next]
    b_conv_ref,   # (1, D)
    w_out_ref,    # (D, D)      out_proj weight, (in, out)
    b_out_ref,    # (1, D)
    o_ref,        # (TM, D)     output rows
    *, L, D,
):
    x = x_ref[...]                                   # (TM, D), original input (residual)
    TM = x.shape[0]

    # LayerNorm over last dim (eps=1e-5, biased variance, as in torch)
    mean = jnp.mean(x, axis=-1, keepdims=True)
    var = jnp.mean((x - mean) ** 2, axis=-1, keepdims=True)
    xn = (x - mean) * jax.lax.rsqrt(var + 1e-5)
    xn = xn * ln_g_ref[0] + ln_b_ref[0]

    # Fused in_proj: one matmul D -> 2D, then split into (x, gate) halves.
    h = jnp.dot(xn, w_in_ref[...], preferred_element_type=jnp.float32) + b_in_ref[0]
    xc = h[:, :D]
    gate = h[:, D:]

    # Conv1d (kernel_size=3, padding=1) along the sequence axis.
    # Shift rows with pltpu.roll (XLU) and zero the rows that would wrap
    # across a sequence boundary (pos % L == 0 for x[l-1], == L-1 for x[l+1]).
    # Tiles contain whole batch elements, so this masking also makes the
    # roll-wrap at tile edges and the batch folding exact.
    pos = jax.lax.broadcasted_iota(jnp.int32, (TM, D), 0) % L
    x_prev = jnp.where(pos != 0, pltpu.roll(xc, shift=1, axis=0), 0.0)
    x_next = jnp.where(pos != L - 1, pltpu.roll(xc, shift=TM - 1, axis=0), 0.0)

    # Single K=3D conv matmul:  y = [x_prev | xc | x_next] @ W_cat + b
    xcat = jnp.concatenate([x_prev, xc, x_next], axis=-1)         # (TM, 3D)
    y = jnp.dot(xcat, w_conv_ref[...], preferred_element_type=jnp.float32) + b_conv_ref[0]

    # Gate, out_proj, residual
    g = y * jax.nn.sigmoid(gate)
    out = jnp.dot(g, w_out_ref[...], preferred_element_type=jnp.float32) + b_out_ref[0]
    o_ref[...] = out + x


def toy_mamba_block(x, params, *, target_rows=512):
    """x: (B, L, D) float32.  params: dict of PyTorch-shaped parameters."""
    B, L, D = x.shape
    M = B * L

    # Rows per tile: a multiple of L (tiles align with sequence boundaries so
    # the conv masking is exact), a divisor of M, and a multiple of 8 where
    # possible; target ~512 rows per step for MXU/pipeline efficiency.
    tb = max(1, min(B, max(1, target_rows // max(L, 1))))
    while B % tb != 0:
        tb -= 1
    TM = tb * L
    if TM % 8 != 0 and TM != M:
        TM = M          # fall back to a single tile if alignment fails
    grid = (M // TM,)

    # --- parameter plumbing (glue, plain JAX) ---
    w_in_t = params["w_in"].T                       # (D, 2D): cols [:D]=x half, [D:]=gate half
    b_in = params["b_in"].reshape(1, 2 * D)
    w_conv = params["w_conv"]                       # (D, D, 3) nn.Conv1d weight (out, in, k)
    w_conv_cat = jnp.concatenate(
        [w_conv[:, :, 0].T, w_conv[:, :, 1].T, w_conv[:, :, 2].T], axis=0
    )                                               # (3D, D), rows match [x_prev|xc|x_next]
    b_conv = params["b_conv"].reshape(1, D)
    w_out_t = params["w_out"].T                     # (D, D) (in, out)
    b_out = params["b_out"].reshape(1, D)
    ln_g = params["ln_g"].reshape(1, D)
    ln_b = params["ln_b"].reshape(1, D)

    x2 = x.reshape(M, D)

    row_spec = pl.BlockSpec((TM, D), lambda i: (i, 0))

    def const_spec(shape):
        return pl.BlockSpec(shape, lambda i: (0, 0))

    kernel = functools.partial(mamba_block_kernel, L=L, D=D)

    out = pl.pallas_call(
        kernel,
        out_shape=jax.ShapeDtypeStruct((M, D), jnp.float32),
        grid_spec=pltpu.PrefetchScalarGridSpec(
            num_scalar_prefetch=0,
            grid=grid,
            in_specs=[
                row_spec,                                   # x rows
                const_spec((1, D)), const_spec((1, D)),     # ln_g, ln_b
                const_spec((D, 2 * D)), const_spec((1, 2 * D)),   # fused in_proj
                const_spec((3 * D, D)), const_spec((1, D)),       # stacked conv taps + bias
                const_spec((D, D)), const_spec((1, D)),           # out_proj
            ],
            out_specs=row_spec,
        ),
        compiler_params=pltpu.CompilerParams(
            dimension_semantics=("parallel",),
            vmem_limit_bytes=48 * 1024 * 1024,
        ),
    )(x2, ln_g, ln_b, w_in_t, b_in, w_conv_cat, b_conv, w_out_t, b_out)
    return out.reshape(B, L, D)


def ref_forward(x, params):
    """Pure-JAX reference mirroring the PyTorch forward exactly."""
    D = x.shape[-1]
    residual = x
    mean = x.mean(-1, keepdims=True)
    var = ((x - mean) ** 2).mean(-1, keepdims=True)
    xn = (x - mean) / jnp.sqrt(var + 1e-5) * params["ln_g"] + params["ln_b"]
    h = xn @ params["w_in"].T + params["b_in"]
    xc, gate = h[..., :D], h[..., D:]
    # conv1d with kernel_size=3, padding=1 (in (B, L, D) layout)
    xpad = jnp.pad(xc, ((0, 0), (1, 1), (0, 0)))
    L = x.shape[1]
    y = params["b_conv"]
    for k in range(3):
        y = y + xpad[:, k:k + L, :] @ params["w_conv"][:, :, k].T
    g = y * jax.nn.sigmoid(gate)
    out = g @ params["w_out"].T + params["b_out"]
    return out + residual


def init_params(key, d_model):
    ks = jax.random.split(key, 10)
    s = 0.05
    return {
        "ln_g": 1.0 + s * jax.random.normal(ks[0], (d_model,), jnp.float32),
        "ln_b": s * jax.random.normal(ks[1], (d_model,), jnp.float32),
        "w_in": s * jax.random.normal(ks[2], (2 * d_model, d_model), jnp.float32),
        "b_in": s * jax.random.normal(ks[3], (2 * d_model,), jnp.float32),
        "w_conv": s * jax.random.normal(ks[4], (d_model, d_model, 3), jnp.float32),
        "b_conv": s * jax.random.normal(ks[5], (d_model,), jnp.float32),
        "w_out": s * jax.random.normal(ks[6], (d_model, d_model), jnp.float32),
        "b_out": s * jax.random.normal(ks[7], (d_model,), jnp.float32),
        # x_proj exists in the module but is unused in forward; keep for parity.
        "w_x_proj": s * jax.random.normal(ks[8], (d_model, d_model), jnp.float32),
        "b_x_proj": s * jax.random.normal(ks[9], (d_model,), jnp.float32),
    }


if __name__ == "__main__":
    B, L, D = 2, 8, 32   # small shapes: batch=2, seq=8, d_model=32
    key = jax.random.PRNGKey(0)
    kx, kp = jax.random.split(key)
    x = jax.random.normal(kx, (B, L, D), jnp.float32)
    params = init_params(kp, D)

    out = toy_mamba_block(x, params)
    out = jax.block_until_ready(out)

    ref = ref_forward(x, params)
    assert out.shape == (B, L, D)
    assert jnp.allclose(out, ref, atol=1e-4, rtol=1e-4), (
        f"max abs err = {jnp.max(jnp.abs(out - ref))}"
    )
    print("KERNEL_OK")
</pallas_src>

<mosaic_0001>
module attributes {stable_mosaic.version = 11 : i64} {
  func.func @mamba_block_kernel(%arg0: i32, %arg1: memref<16x32xf32, #tpu.memory_space<vmem>>, %arg2: memref<1x32xf32, #tpu.memory_space<vmem>>, %arg3: memref<1x32xf32, #tpu.memory_space<vmem>>, %arg4: memref<32x64xf32, #tpu.memory_space<vmem>>, %arg5: memref<1x64xf32, #tpu.memory_space<vmem>>, %arg6: memref<96x32xf32, #tpu.memory_space<vmem>>, %arg7: memref<1x32xf32, #tpu.memory_space<vmem>>, %arg8: memref<32x32xf32, #tpu.memory_space<vmem>>, %arg9: memref<1x32xf32, #tpu.memory_space<vmem>>, %arg10: memref<16x32xf32, #tpu.memory_space<vmem>>) attributes {dimension_semantics = [#tpu.dimension_semantics<parallel>], iteration_bounds = array<i64: 1>, scalar_prefetch = 0 : i64, scratch_operands = 0 : i64, tpu.core_type = #tpu.core_type<tc>, window_params = [{transform_indices = @transform_0, window_bounds = array<i64: 16, 32>}, {pipeline_mode = #tpu.pipeline_mode<synchronous>, transform_indices = @transform_1, window_bounds = array<i64: 1, 32>}, {pipeline_mode = #tpu.pipeline_mode<synchronous>, transform_indices = @transform_2, window_bounds = array<i64: 1, 32>}, {pipeline_mode = #tpu.pipeline_mode<synchronous>, transform_indices = @transform_3, window_bounds = array<i64: 32, 64>}, {pipeline_mode = #tpu.pipeline_mode<synchronous>, transform_indices = @transform_4, window_bounds = array<i64: 1, 64>}, {pipeline_mode = #tpu.pipeline_mode<synchronous>, transform_indices = @transform_5, window_bounds = array<i64: 96, 32>}, {pipeline_mode = #tpu.pipeline_mode<synchronous>, transform_indices = @transform_6, window_bounds = array<i64: 1, 32>}, {pipeline_mode = #tpu.pipeline_mode<synchronous>, transform_indices = @transform_7, window_bounds = array<i64: 32, 32>}, {pipeline_mode = #tpu.pipeline_mode<synchronous>, transform_indices = @transform_8, window_bounds = array<i64: 1, 32>}, {transform_indices = @transform_9, window_bounds = array<i64: 16, 32>}]} {
    %c0 = arith.constant 0 : index
    %c0_0 = arith.constant 0 : index
    %0 = vector.load %arg1[%c0, %c0_0] : memref<16x32xf32, #tpu.memory_space<vmem>>, vector<16x32xf32>
    %cst = arith.constant dense<0.000000e+00> : vector<16xf32>
    %1 = vector.multi_reduction <add>, %0, %cst [1] : vector<16x32xf32> to vector<16xf32>
    %2 = vector.shape_cast %1 : vector<16xf32> to vector<16x1xf32>
    %cst_1 = arith.constant 3.200000e+01 : f32
    %3 = vector.broadcast %cst_1 : f32 to vector<16x1xf32>
    %4 = arith.divf %2, %3 : vector<16x1xf32>
    %5 = vector.broadcast %4 : vector<16x1xf32> to vector<16x32xf32>
    %6 = arith.subf %0, %5 : vector<16x32xf32>
    %7 = arith.mulf %6, %6 : vector<16x32xf32>
    %cst_2 = arith.constant dense<0.000000e+00> : vector<16xf32>
    %8 = vector.multi_reduction <add>, %7, %cst_2 [1] : vector<16x32xf32> to vector<16xf32>
    %9 = vector.shape_cast %8 : vector<16xf32> to vector<16x1xf32>
    %cst_3 = arith.constant 3.200000e+01 : f32
    %10 = vector.broadcast %cst_3 : f32 to vector<16x1xf32>
    %11 = arith.divf %9, %10 : vector<16x1xf32>
    %12 = vector.broadcast %4 : vector<16x1xf32> to vector<16x32xf32>
    %13 = arith.subf %0, %12 : vector<16x32xf32>
    %cst_4 = arith.constant 9.99999974E-6 : f32
    %14 = vector.broadcast %cst_4 : f32 to vector<16x1xf32>
    %15 = arith.addf %11, %14 : vector<16x1xf32>
    %16 = math.rsqrt %15 : vector<16x1xf32>
    %17 = vector.broadcast %16 : vector<16x1xf32> to vector<16x32xf32>
    %18 = arith.mulf %13, %17 : vector<16x32xf32>
    %c0_5 = arith.constant 0 : index
    %c0_6 = arith.constant 0 : index
    %19 = vector.load %arg2[%c0_5, %c0_6] : memref<1x32xf32, #tpu.memory_space<vmem>>, vector<1x32xf32>
    %20 = vector.shape_cast %19 : vector<1x32xf32> to vector<32xf32>
    %21 = vector.shape_cast %20 : vector<32xf32> to vector<1x32xf32>
    %22 = vector.broadcast %21 : vector<1x32xf32> to vector<16x32xf32>
    %23 = arith.mulf %18, %22 : vector<16x32xf32>
    %c0_7 = arith.constant 0 : index
    %c0_8 = arith.constant 0 : index
    %24 = vector.load %arg3[%c0_7, %c0_8] : memref<1x32xf32, #tpu.memory_space<vmem>>, vector<1x32xf32>
    %25 = vector.shape_cast %24 : vector<1x32xf32> to vector<32xf32>
    %26 = vector.shape_cast %25 : vector<32xf32> to vector<1x32xf32>
    %27 = vector.broadcast %26 : vector<1x32xf32> to vector<16x32xf32>
    %28 = arith.addf %23, %27 : vector<16x32xf32>
    %c0_9 = arith.constant 0 : index
    %c0_10 = arith.constant 0 : index
    %29 = vector.load %arg4[%c0_9, %c0_10] : memref<32x64xf32, #tpu.memory_space<vmem>>, vector<32x64xf32>
    %cst_11 = arith.constant dense<0.000000e+00> : vector<16x64xf32>
    %30 = tpu.matmul %28, %29, %cst_11 {dimension_numbers = #tpu.dot_dimension_numbers<[1], [0], [0], [1], [0, 0, 1, 1], [], []>} : vector<16x32xf32>, vector<32x64xf32>, vector<16x64xf32> -> vector<16x64xf32>
    %c0_12 = arith.constant 0 : index
    %c0_13 = arith.constant 0 : index
    %31 = vector.load %arg5[%c0_12, %c0_13] : memref<1x64xf32, #tpu.memory_space<vmem>>, vector<1x64xf32>
    %32 = vector.shape_cast %31 : vector<1x64xf32> to vector<64xf32>
    %33 = vector.shape_cast %32 : vector<64xf32> to vector<1x64xf32>
    %34 = vector.broadcast %33 : vector<1x64xf32> to vector<16x64xf32>
    %35 = arith.addf %30, %34 : vector<16x64xf32>
    %36 = vector.extract_strided_slice %35 {offsets = [0, 0], sizes = [16, 32], strides = [1, 1]} : vector<16x64xf32> to vector<16x32xf32>
    %37 = vector.extract_strided_slice %35 {offsets = [0, 32], sizes = [16, 32], strides = [1, 1]} : vector<16x64xf32> to vector<16x32xf32>
    %38 = tpu.iota {dimensions = array<i32: 0>} : vector<16x32xi32>
    %c8_i32 = arith.constant 8 : i32
    %c0_i32 = arith.constant 0 : i32
    %39 = arith.cmpi eq, %c8_i32, %c0_i32 : i32
    %c1_i32 = arith.constant 1 : i32
    %40 = arith.select %39, %c1_i32, %c8_i32 : i32
    %41 = vector.broadcast %40 : i32 to vector<16x32xi32>
    %42 = arith.remsi %38, %41 : vector<16x32xi32>
    %c0_i32_14 = arith.constant 0 : i32
    %43 = vector.broadcast %c0_i32_14 : i32 to vector<16x32xi32>
    %44 = arith.cmpi ne, %42, %43 : vector<16x32xi32>
    %c0_i32_15 = arith.constant 0 : i32
    %45 = vector.broadcast %c0_i32_15 : i32 to vector<16x32xi32>
    %46 = arith.cmpi slt, %42, %45 : vector<16x32xi32>
    %c0_i32_16 = arith.constant 0 : i32
    %47 = arith.cmpi slt, %40, %c0_i32_16 : i32
    %48 = vector.broadcast %47 : i1 to vector<16x32xi1>
    %49 = vector.broadcast %48 : vector<16x32xi1> to vector<16x32xi1>
    %50 = arith.xori %46, %49 : vector<16x32xi1>
    %51 = arith.andi %50, %44 : vector<16x32xi1>
    %52 = vector.broadcast %40 : i32 to vector<16x32xi32>
    %53 = arith.addi %42, %52 : vector<16x32xi32>
    %54 = arith.select %51, %53, %42 : vector<16x32xi1>, vector<16x32xi32>
    %c0_i32_17 = arith.constant 0 : i32
    %55 = vector.broadcast %c0_i32_17 : i32 to vector<16x32xi32>
    %56 = arith.cmpi ne, %54, %55 : vector<16x32xi32>
    %c1_i32_18 = arith.constant 1 : i32
    %57 = tpu.dynamic_rotate %36 by %c1_i32_18 dim 0 : vector<16x32xf32>, i32 -> vector<16x32xf32>
    %cst_19 = arith.constant 0.000000e+00 : f32
    %58 = vector.broadcast %cst_19 : f32 to vector<16x32xf32>
    %59 = arith.select %56, %57, %58 : vector<16x32xi1>, vector<16x32xf32>
    %c7_i32 = arith.constant 7 : i32
    %60 = vector.broadcast %c7_i32 : i32 to vector<16x32xi32>
    %61 = arith.cmpi ne, %54, %60 : vector<16x32xi32>
    %c15_i32 = arith.constant 15 : i32
    %62 = tpu.dynamic_rotate %36 by %c15_i32 dim 0 : vector<16x32xf32>, i32 -> vector<16x32xf32>
    %cst_20 = arith.constant 0.000000e+00 : f32
    %63 = vector.broadcast %cst_20 : f32 to vector<16x32xf32>
    %64 = arith.select %61, %62, %63 : vector<16x32xi1>, vector<16x32xf32>
    %65 = tpu.concatenate %59, %36, %64 in 1 : vector<16x32xf32>, vector<16x32xf32>, vector<16x32xf32> -> vector<16x96xf32>
    %c0_21 = arith.constant 0 : index
    %c0_22 = arith.constant 0 : index
    %66 = vector.load %arg6[%c0_21, %c0_22] : memref<96x32xf32, #tpu.memory_space<vmem>>, vector<96x32xf32>
    %cst_23 = arith.constant dense<0.000000e+00> : vector<16x32xf32>
    %67 = tpu.matmul %65, %66, %cst_23 {dimension_numbers = #tpu.dot_dimension_numbers<[1], [0], [0], [1], [0, 0, 1, 1], [], []>} : vector<16x96xf32>, vector<96x32xf32>, vector<16x32xf32> -> vector<16x32xf32>
    %c0_24 = arith.constant 0 : index
    %c0_25 = arith.constant 0 : index
    %68 = vector.load %arg7[%c0_24, %c0_25] : memref<1x32xf32, #tpu.memory_space<vmem>>, vector<1x32xf32>
    %69 = vector.shape_cast %68 : vector<1x32xf32> to vector<32xf32>
    %70 = vector.shape_cast %69 : vector<32xf32> to vector<1x32xf32>
    %71 = vector.broadcast %70 : vector<1x32xf32> to vector<16x32xf32>
    %72 = arith.addf %67, %71 : vector<16x32xf32>
    %73 = arith.negf %37 : vector<16x32xf32>
    %74 = math.exp %73 : vector<16x32xf32>
    %cst_26 = arith.constant 1.000000e+00 : f32
    %75 = vector.broadcast %cst_26 : f32 to vector<16x32xf32>
    %76 = arith.addf %75, %74 : vector<16x32xf32>
    %77 = arith.divf %75, %76 : vector<16x32xf32>
    %78 = arith.mulf %72, %77 : vector<16x32xf32>
    %c0_27 = arith.constant 0 : index
    %c0_28 = arith.constant 0 : index
    %79 = vector.load %arg8[%c0_27, %c0_28] : memref<32x32xf32, #tpu.memory_space<vmem>>, vector<32x32xf32>
    %cst_29 = arith.constant dense<0.000000e+00> : vector<16x32xf32>
    %80 = tpu.matmul %78, %79, %cst_29 {dimension_numbers = #tpu.dot_dimension_numbers<[1], [0], [0], [1], [0, 0, 1, 1], [], []>} : vector<16x32xf32>, vector<32x32xf32>, vector<16x32xf32> -> vector<16x32xf32>
    %c0_30 = arith.constant 0 : index
    %c0_31 = arith.constant 0 : index
    %81 = vector.load %arg9[%c0_30, %c0_31] : memref<1x32xf32, #tpu.memory_space<vmem>>, vector<1x32xf32>
    %82 = vector.shape_cast %81 : vector<1x32xf32> to vector<32xf32>
    %83 = vector.shape_cast %82 : vector<32xf32> to vector<1x32xf32>
    %84 = vector.broadcast %83 : vector<1x32xf32> to vector<16x32xf32>
    %85 = arith.addf %80, %84 : vector<16x32xf32>
    %86 = arith.addf %85, %0 : vector<16x32xf32>
    %c0_32 = arith.constant 0 : index
    %c0_33 = arith.constant 0 : index
    %87 = vector.load %arg10[%c0_32, %c0_33] : memref<16x32xf32, #tpu.memory_space<vmem>>, vector<16x32xf32>
    tpu.vector_store %arg10[%c0_32, %c0_33], %86 {strides = array<i32>} : memref<16x32xf32, #tpu.memory_space<vmem>>, vector<16x32xf32>,
    return
  }
  func.func @transform_0(%arg0: i32) -> (i32, i32) {
    %c0_i32 = arith.constant 0 : i32
    %c0_i32_0 = arith.constant 0 : i32
    return %arg0, %c0_i32 : i32, i32
  }
  func.func @transform_1(%arg0: i32) -> (i32, i32) {
    %c0_i32 = arith.constant 0 : i32
    %c0_i32_0 = arith.constant 0 : i32
    %c0_i32_1 = arith.constant 0 : i32
    return %c0_i32, %c0_i32_0 : i32, i32
  }
  func.func @transform_2(%arg0: i32) -> (i32, i32) {
    %c0_i32 = arith.constant 0 : i32
    %c0_i32_0 = arith.constant 0 : i32
    %c0_i32_1 = arith.constant 0 : i32
    return %c0_i32, %c0_i32_0 : i32, i32
  }
  func.func @transform_3(%arg0: i32) -> (i32, i32) {
    %c0_i32 = arith.constant 0 : i32
    %c0_i32_0 = arith.constant 0 : i32
    %c0_i32_1 = arith.constant 0 : i32
    return %c0_i32, %c0_i32_0 : i32, i32
  }
  func.func @transform_4(%arg0: i32) -> (i32, i32) {
    %c0_i32 = arith.constant 0 : i32
    %c0_i32_0 = arith.constant 0 : i32
    %c0_i32_1 = arith.constant 0 : i32
    return %c0_i32, %c0_i32_0 : i32, i32
  }
  func.func @transform_5(%arg0: i32) -> (i32, i32) {
    %c0_i32 = arith.constant 0 : i32
    %c0_i32_0 = arith.constant 0 : i32
    %c0_i32_1 = arith.constant 0 : i32
    return %c0_i32, %c0_i32_0 : i32, i32
  }
  func.func @transform_6(%arg0: i32) -> (i32, i32) {
    %c0_i32 = arith.constant 0 : i32
    %c0_i32_0 = arith.constant 0 : i32
    %c0_i32_1 = arith.constant 0 : i32
    return %c0_i32, %c0_i32_0 : i32, i32
  }
  func.func @transform_7(%arg0: i32) -> (i32, i32) {
    %c0_i32 = arith.constant 0 : i32
    %c0_i32_0 = arith.constant 0 : i32
    %c0_i32_1 = arith.constant 0 : i32
    return %c0_i32, %c0_i32_0 : i32, i32
  }
  func.func @transform_8(%arg0: i32) -> (i32, i32) {
    %c0_i32 = arith.constant 0 : i32
    %c0_i32_0 = arith.constant 0 : i32
    %c0_i32_1 = arith.constant 0 : i32
    return %c0_i32, %c0_i32_0 : i32, i32
  }
  func.func @transform_9(%arg0: i32) -> (i32, i32) {
    %c0_i32 = arith.constant 0 : i32
    %c0_i32_0 = arith.constant 0 : i32
    return %arg0, %c0_i32 : i32, i32
  }
}

</mosaic_0001>

<llo_original>
// kernel: tpu_custom_call.1
$region0: #{tpu_custom_call.1}
  #allocation0 [shape = 'u32[]', space=smem, size = 0x4, offset = 0x4, fixed_abs, tag = 'smem constant byte address 0x4 - core index']
  #allocation1 [shape = 'u32[144,128]{1,0:T(1,128)}', space=vmem, size = 0x12000, scoped, tag = 'internal scratch']
  %s0 = inlined_call_operand.vmem [shape: f32[16,32], index: 0, kind: input, shape index: {}]
  %s1 = inlined_call_operand.vmem [shape: f32[1,32], index: 1, kind: input, shape index: {}]
  %s2 = inlined_call_operand.vmem [shape: f32[1,32], index: 2, kind: input, shape index: {}]
  %s3 = inlined_call_operand.vmem [shape: f32[32,64], index: 3, kind: input, shape index: {}]
  %s4 = inlined_call_operand.vmem [shape: f32[1,64], index: 4, kind: input, shape index: {}]
  %s5 = inlined_call_operand.vmem [shape: f32[96,32], index: 5, kind: input, shape index: {}]
  %s6 = inlined_call_operand.vmem [shape: f32[1,32], index: 6, kind: input, shape index: {}]
  %s7 = inlined_call_operand.vmem [shape: f32[32,32], index: 7, kind: input, shape index: {}]
  %s8 = inlined_call_operand.vmem [shape: f32[1,32], index: 8, kind: input, shape index: {}]
  %s9 = inlined_call_operand.hbm [shape: f32[16,32], index: 9, kind: output, shape index: {}]
  %s10 = sld [smem:[#allocation0]]
  $region46: #{tpu_custom_call.1} parent=0
    _
  %s12 = ssub.s32 1, %s10
  %s13 = scalar_select 0, %s12, %s10
  $region1: #{tpu_custom_call.1} parent=0
    #allocation2 [shape = 'u8[8192]{0}', space=vmem, size = 0x2000, scoped, tag = 'output window, operand 0, single buffered']
    #allocation3 [shape = 's32[1]{0}', space=sflag, size = 0x4, scoped, tag = 'scoped memory for tpu_custom_call.1']
    %14 = vsyncpa [#allocation3], 0
    // Predicated region
    $region2: #{tpu_custom_call.1} parent=1 // pred_check
      _
    $region3: #{tpu_custom_call.1} parent=1 // pred_check_branch
      %16 = sbr.rel (0) target = $region5
    $region4: #{tpu_custom_call.1} parent=1 // pred_region
      _
    $region5: #{tpu_custom_call.1} parent=1 // pred_fallthru
      _
    // Predicated region
    $region6: #{tpu_custom_call.1} parent=1 // pred_check
      _
    $region7: #{tpu_custom_call.1} parent=1 // pred_check_branch
      %18 = sbr.rel (0) target = $region9
    $region8: #{tpu_custom_call.1} parent=1 // pred_region
      _
    $region9: #{tpu_custom_call.1} parent=1 // pred_fallthru
      _
    // Predicated region
    $region10: #{tpu_custom_call.1} parent=1 // pred_check
      _
    $region11: #{tpu_custom_call.1} parent=1 // pred_check_branch
      %20 = sbr.rel (0) target = $region13
    $region12: #{tpu_custom_call.1} parent=1 // pred_region
      _
    $region13: #{tpu_custom_call.1} parent=1 // pred_fallthru
      _
    // Predicated region
    $region14: #{tpu_custom_call.1} parent=1 // pred_check
      _
    $region15: #{tpu_custom_call.1} parent=1 // pred_check_branch
      %22 = sbr.rel (0) target = $region17
    $region16: #{tpu_custom_call.1} parent=1 // pred_region
      _
    $region17: #{tpu_custom_call.1} parent=1 // pred_fallthru
      _
    // Predicated region
    $region18: #{tpu_custom_call.1} parent=1 // pred_check
      _
    $region19: #{tpu_custom_call.1} parent=1 // pred_check_branch
      %24 = sbr.rel (0) target = $region21
    $region20: #{tpu_custom_call.1} parent=1 // pred_region
      _
    $region21: #{tpu_custom_call.1} parent=1 // pred_fallthru
      _
    // Predicated region
    $region22: #{tpu_custom_call.1} parent=1 // pred_check
      _
    $region23: #{tpu_custom_call.1} parent=1 // pred_check_branch
      %26 = sbr.rel (0) target = $region25
    $region24: #{tpu_custom_call.1} parent=1 // pred_region
      _
    $region25: #{tpu_custom_call.1} parent=1 // pred_fallthru
      _
    // Predicated region
    $region26: #{tpu_custom_call.1} parent=1 // pred_check
      _
    $region27: #{tpu_custom_call.1} parent=1 // pred_check_branch
      %28 = sbr.rel (0) target = $region29
    $region28: #{tpu_custom_call.1} parent=1 // pred_region
      _
    $region29: #{tpu_custom_call.1} parent=1 // pred_fallthru
      _
    // Predicated region
    $region30: #{tpu_custom_call.1} parent=1 // pred_check
      _
    $region31: #{tpu_custom_call.1} parent=1 // pred_check_branch
      %30 = sbr.rel (0) target = $region33
    $region32: #{tpu_custom_call.1} parent=1 // pred_region
      _
    $region33: #{tpu_custom_call.1} parent=1 // pred_fallthru
      _
    // Predicated region
    $region34: #{tpu_custom_call.1} parent=1 // pred_check
      _
    $region35: #{tpu_custom_call.1} parent=1 // pred_check_branch
      %32 = sbr.rel (0) target = $region37
    $region36: #{tpu_custom_call.1} parent=1 // pred_region
      _
    $region37: #{tpu_custom_call.1} parent=1 // pred_fallthru
      _
    %v33 = vld [vmem:[%s0] sm:$0xff]
    %v34 = vld [vmem:[%s0 + $0x8] sm:$0xff]
    %vm35 = vcmask 261120
    %v36 = vsel %vm35, %v33, 0.0
    %37 = vadd.xlane.f32.xlu0 %v36
    %v38 = vpop.xlane.xlu0 %37
    %v39 = vsel %vm35, %v34, 0.0
    %40 = vadd.xlane.f32.xlu0 %v39
    %v41 = vpop.xlane.xlu0 %40
    %v42 = vrcp.pop 32.0
    %v43 = vmul.f32 %v38, %v42
    %v44 = vmul.f32 %v41, %v42
    %v45 = vsub.f32 %v33, %v43
    %v46 = vsub.f32 %v34, %v44
    %v47 = vmul.f32 %v45, %v45
    %v48 = vmul.f32 %v46, %v46
    %v49 = vsel %vm35, %v47, 0.0
    %50 = vadd.xlane.f32.xlu0 %v49
    %v51 = vpop.xlane.xlu0 %50
    %v52 = vsel %vm35, %v48, 0.0
    %53 = vadd.xlane.f32.xlu0 %v52
    %v54 = vpop.xlane.xlu0 %53
    %v55 = vmul.f32 %v51, %v42
    %v56 = vmul.f32 %v54, %v42
    %v57 = vadd.f32 %v55, 1e-05
    %v58 = vadd.f32 %v56, 1e-05
    %v59 = vrsqrt.pop %v57
    %v60 = vrsqrt.pop %v58
    %v61 = vmul.f32 %v45, %v59
    %v62 = vmul.f32 %v46, %v60
    %v63 = vld [vmem:[%s1] sm:$0x1]
    %v65 = vlaneseq
    %v66 = vshrl.u32 %v65, 7
    %v67 = vsub.s32 0, %v66
    %v68 = vrot.slane %v63, %v67
    %v70 = vmul.f32 %v61, %v68
    %v71 = vmul.f32 %v62, %v68
    %v72 = vld [vmem:[%s2] sm:$0x1]
    %v74 = vlaneseq
    %v75 = vshrl.u32 %v74, 7
    %v76 = vsub.s32 0, %v75
    %v77 = vrot.slane %v72, %v76
    %v79 = vadd.f32 %v70, %v77
    %v80 = vadd.f32 %v71, %v77
    %v81 = vld [vmem:[%s3] sm:$0xff]
    %v82 = vld [vmem:[%s3 + $0x8] sm:$0xff]
    %v83 = vld [vmem:[%s3 + $0x10] sm:$0xff]
    %v84 = vld [vmem:[%s3 + $0x18] sm:$0xff]
    %v85 = vld [vmem:[%s4] sm:$0x1]
    %v87 = vlaneseq
    %v88 = vshrl.u32 %v87, 7
    %v89 = vsub.s32 0, %v88
    %v90 = vrot.slane %v85, %v89
    %v93 = vsel %vm35, %v79, 0
    %v96 = vsel %vm35, %v80, 0
    %98 = vmatprep.subr.mxu0 0.0
    %99 = vmatpush1.msra.mxu0 %v81
    %100 = vmatprep.subr.mxu0 0.0
    %101 = vmatpush1.msra.mxu0 %v82
    %102 = vmatprep.subr.mxu0 0.0
    %103 = vmatpush1.msra.mxu0 %v83
    %104 = vmatprep.subr.mxu0 0.0
    %105 = vmatpush1.msra.mxu0 %v84
    %106 = vmatprep.subr.mxu0 0.0
    %107 = vmatpush1.msra.mxu0 0.0
    %108 = vmatprep.subr.mxu0 0.0
    %109 = vmatpush1.msra.mxu0 0.0
    %110 = vmatprep.subr.mxu0 0.0
    %111 = vmatpush1.msra.mxu0 0.0
    %112 = vmatprep.subr.mxu0 0.0
    %113 = vmatpush1.msra.mxu0 0.0
    %114 = vmatprep.subr.mxu0 0.0
    %115 = vmatpush1.msra.mxu0 0.0
    %116 = vmatprep.subr.mxu0 0.0
    %117 = vmatpush1.msra.mxu0 0.0
    %118 = vmatprep.subr.mxu0 0.0
    %119 = vmatpush1.msra.mxu0 0.0
    %120 = vmatprep.subr.mxu0 0.0
    %121 = vmatpush1.msra.mxu0 0.0
    %122 = vmatprep.subr.mxu0 0.0
    %123 = vmatpush1.msra.mxu0 0.0
    %124 = vmatprep.subr.mxu0 0.0
    %125 = vmatpush1.msra.mxu0 0.0
    %126 = vmatprep.subr.mxu0 0.0
    %127 = vmatpush1.msra.mxu0 0.0
    %128 = vmatprep.subr.mxu0 0.0
    %129 = vmatpush1.msra.mxu0 0.0
    %130 = vmatprep.subr.mxu0 0.0
    %131 = vmatpush1.msra.mxu0 0.0
    %132 = vmatprep.subr.mxu0 0.0
    %133 = vmatpush1.msra.mxu0 0.0
    %134 = vmatprep.subr.mxu0 0.0
    %135 = vmatpush1.msra.mxu0 0.0
    %136 = vmatprep.subr.mxu0 0.0
    %137 = vmatpush1.msra.mxu0 0.0
    %138 = vmatprep.subr.mxu0 0.0
    %139 = vmatpush1.msra.mxu0 0.0
    %140 = vmatprep.subr.mxu0 0.0
    %141 = vmatpush1.msra.mxu0 0.0
    %142 = vmatprep.subr.mxu0 0.0
    %143 = vmatpush1.msra.mxu0 0.0
    %144 = vmatprep.subr.mxu0 0.0
    %145 = vmatpush1.msra.mxu0 0.0
    %146 = vmatprep.subr.mxu0 0.0
    %147 = vmatpush1.msra.mxu0 0.0
    %148 = vmatprep.subr.mxu0 0.0
    %149 = vmatpush1.msra.mxu0 0.0
    %150 = vmatprep.subr.mxu0 0.0
    %151 = vmatpush1.msra.mxu0 0.0
    %152 = vmatprep.subr.mxu0 0.0
    %153 = vmatpush1.msra.mxu0 0.0
    %154 = vmatprep.subr.mxu0 0.0
    %155 = vmatpush1.msra.mxu0 0.0
    %156 = vmatprep.subr.mxu0 0.0
    %157 = vmatpush1.msra.mxu0 0.0
    %158 = vmatprep.subr.mxu0 0.0
    %159 = vmatpush1.msra.mxu0 0.0
    %160 = vmatprep.subr.mxu0 0.0
    %161 = vmatpush1.msra.mxu0 0.0
    %162 = vmatprep.mubr.f32.mxu0 0.0
    %163 = vmatmul.mubr.f32.gmra.mrb[0].mxu0 %v93
    %v164 = vpop.f32.mrb[0].mxu0
    %v165 = vadd.f32 %v90, %v164
    %v166 = vpop.f32.mrb[0].mxu0
    %167 = vmatprep.mubr.f32.mxu0 0.0
    %168 = vmatmul.mubr.f32.gmra.mrb[0].mxu0 %v96
    %v169 = vpop.f32.mrb[0].mxu0
    %v170 = vadd.f32 %v90, %v169
    %v171 = vpop.f32.mrb[0].mxu0
    %172 = vdwg.mxu0
    %v173 = vlaneseq
    %v174 = vshrl.u32 %v173, 7
    %v175 = vadd.s32 %v174, 8
    %vm176 = vcmp.lt.s32.totalorder %v174, 0
    %v177 = vsub.s32 0, %v174
    %v178 = vsel %vm176, %v177, %v174
    %v179 = vshrl.u32 %v178, 3
    %v180 = vand.u32 %v178, 7
    %v181 = vsub.s32 0, %v180
    %v182 = vsel %vm176, %v181, %v180
    %vm183 = vcmp.lt.s32.totalorder %v175, 0
    %v184 = vsub.s32 0, %v175
    %v185 = vsel %vm183, %v184, %v175
    %v186 = vshrl.u32 %v185, 3
    %v187 = vand.u32 %v185, 7
    %v188 = vsub.s32 0, %v187
    %v189 = vsel %vm183, %v188, %v187
    %vm190 = vcmp.ne.s32.totalorder %v182, 0
    %vm191 = vcmp.ne.s32.totalorder %v189, 0
    %vm192 = vcmp.lt.s32.totalorder %v182, 0
    %vm193 = vcmp.lt.s32.totalorder %v189, 0
    %vm194 = vmand %vm192, %vm190
    %vm195 = vmand %vm193, %vm191
    %v196 = vadd.s32 %v182, 8
    %v197 = vadd.s32 %v189, 8
    %v198 = vsel %vm194, %v196, %v182
    %v199 = vsel %vm195, %v197, %v189
    %vm200 = vcmp.ne.s32.totalorder %v198, 0
    %vm201 = vcmp.ne.s32.totalorder %v199, 0
    %v202 = vrot.slane %v165, 7
    %v203 = vrot.slane %v170, 7
    %vm204 = vcmp.lt.s32.totalorder %v174, 1
    %v205 = vsel %vm204, %v202, %v203
    %v206 = vsel %vm204, %v203, %v202
    %v207 = vsel %vm200, %v206, 0.0
    %v208 = vsel %vm201, %v205, 0.0
    %vm209 = vcmp.ne.s32.totalorder %v198, 7
    %vm210 = vcmp.ne.s32.totalorder %v199, 7
    %v211 = vrot.slane %v165, 1
    %v212 = vrot.slane %v170, 1
    %vm213 = vcmp.lt.s32.totalorder %v174, 7
    %v214 = vsel %vm213, %v211, %v212
    %v215 = vsel %vm213, %v212, %v211
    %v216 = vsel %vm209, %v214, 0.0
    %v217 = vsel %vm210, %v215, 0.0
    %220 = vrot.lane.b32.xlu0 %v165, 32
    %v221 = vpop.permute.xlu0 %220
    %222 = vrot.lane.b32.xlu0 %v170, 32
    %v223 = vpop.permute.xlu0 %222
    %228 = vrot.lane.b32.xlu0 %v216, 64
    %v229 = vpop.permute.xlu0 %228
    %230 = vrot.lane.b32.xlu0 %v217, 64
    %v231 = vpop.permute.xlu0 %230
    %v234 = vsel %vm35, %v207, %v221
    %v235 = vsel %vm35, %v208, %v223
    %vm236 = vcmask 523264
    %v237 = vsel %vm236, %v234, %v229
    %v238 = vsel %vm236, %v235, %v231
    %v239 = vld [vmem:[%s5] sm:$0xff]
    %v240 = vld [vmem:[%s5 + $0x8] sm:$0xff]
    %v241 = vld [vmem:[%s5 + $0x10] sm:$0xff]
    %v242 = vld [vmem:[%s5 + $0x18] sm:$0xff]
    %v243 = vld [vmem:[%s5 + $0x20] sm:$0xff]
    %v244 = vld [vmem:[%s5 + $0x28] sm:$0xff]
    %v245 = vld [vmem:[%s5 + $0x30] sm:$0xff]
    %v246 = vld [vmem:[%s5 + $0x38] sm:$0xff]
    %v247 = vld [vmem:[%s5 + $0x40] sm:$0xff]
    %v248 = vld [vmem:[%s5 + $0x48] sm:$0xff]
    %v249 = vld [vmem:[%s5 + $0x50] sm:$0xff]
    %v250 = vld [vmem:[%s5 + $0x58] sm:$0xff]
    %v251 = vld [vmem:[%s6] sm:$0x1]
    %v253 = vlaneseq
    %v254 = vshrl.u32 %v253, 7
    %v255 = vsub.s32 0, %v254
    %v256 = vrot.slane %v251, %v255
    %vm258 = vcmask 785408
    %v260 = vsel %vm258, %v237, 0
    %v263 = vsel %vm258, %v238, 0
    %265 = vmatprep.subr.mxu0 0.0
    %266 = vmatpush1.msra.mxu0 %v239
    %267 = vmatprep.subr.mxu0 0.0
    %268 = vmatpush1.msra.mxu0 %v240
    %269 = vmatprep.subr.mxu0 0.0
    %270 = vmatpush1.msra.mxu0 %v241
    %271 = vmatprep.subr.mxu0 0.0
    %272 = vmatpush1.msra.mxu0 %v242
    %273 = vmatprep.subr.mxu0 0.0
    %274 = vmatpush1.msra.mxu0 %v243
    %275 = vmatprep.subr.mxu0 0.0
    %276 = vmatpush1.msra.mxu0 %v244
    %277 = vmatprep.subr.mxu0 0.0
    %278 = vmatpush1.msra.mxu0 %v245
    %279 = vmatprep.subr.mxu0 0.0
    %280 = vmatpush1.msra.mxu0 %v246
    %281 = vmatprep.subr.mxu0 0.0
    %282 = vmatpush1.msra.mxu0 %v247
    %283 = vmatprep.subr.mxu0 0.0
    %284 = vmatpush1.msra.mxu0 %v248
    %285 = vmatprep.subr.mxu0 0.0
    %286 = vmatpush1.msra.mxu0 %v249
    %287 = vmatprep.subr.mxu0 0.0
    %288 = vmatpush1.msra.mxu0 %v250
    %289 = vmatprep.subr.mxu0 0.0
    %290 = vmatpush1.msra.mxu0 0.0
    %291 = vmatprep.subr.mxu0 0.0
    %292 = vmatpush1.msra.mxu0 0.0
    %293 = vmatprep.subr.mxu0 0.0
    %294 = vmatpush1.msra.mxu0 0.0
    %295 = vmatprep.subr.mxu0 0.0
    %296 = vmatpush1.msra.mxu0 0.0
    %297 = vmatprep.subr.mxu0 0.0
    %298 = vmatpush1.msra.mxu0 0.0
    %299 = vmatprep.subr.mxu0 0.0
    %300 = vmatpush1.msra.mxu0 0.0
    %301 = vmatprep.subr.mxu0 0.0
    %302 = vmatpush1.msra.mxu0 0.0
    %303 = vmatprep.subr.mxu0 0.0
    %304 = vmatpush1.msra.mxu0 0.0
    %305 = vmatprep.subr.mxu0 0.0
    %306 = vmatpush1.msra.mxu0 0.0
    %307 = vmatprep.subr.mxu0 0.0
    %308 = vmatpush1.msra.mxu0 0.0
    %309 = vmatprep.subr.mxu0 0.0
    %310 = vmatpush1.msra.mxu0 0.0
    %311 = vmatprep.subr.mxu0 0.0
    %312 = vmatpush1.msra.mxu0 0.0
    %313 = vmatprep.subr.mxu0 0.0
    %314 = vmatpush1.msra.mxu0 0.0
    %315 = vmatprep.subr.mxu0 0.0
    %316 = vmatpush1.msra.mxu0 0.0
    %317 = vmatprep.subr.mxu0 0.0
    %318 = vmatpush1.msra.mxu0 0.0
    %319 = vmatprep.subr.mxu0 0.0
    %320 = vmatpush1.msra.mxu0 0.0
    %321 = vmatprep.subr.mxu0 0.0
    %322 = vmatpush1.msra.mxu0 0.0
    %323 = vmatprep.subr.mxu0 0.0
    %324 = vmatpush1.msra.mxu0 0.0
    %325 = vmatprep.subr.mxu0 0.0
    %326 = vmatpush1.msra.mxu0 0.0
    %327 = vmatprep.subr.mxu0 0.0
    %328 = vmatpush1.msra.mxu0 0.0
    %329 = vmatprep.mubr.f32.mxu0 0.0
    %330 = vmatmul.mubr.f32.gmra.mrb[0].mxu0 %v260
    %v331 = vpop.f32.mrb[0].mxu0
    %v332 = vadd.f32 %v256, %v331
    %v333 = vpop.f32.mrb[0].mxu0
    %334 = vmatprep.mubr.f32.mxu0 0.0
    %335 = vmatmul.mubr.f32.gmra.mrb[0].mxu0 %v263
    %v336 = vpop.f32.mrb[0].mxu0
    %v337 = vadd.f32 %v256, %v336
    %v338 = vpop.f32.mrb[0].mxu0
    %339 = vdwg.mxu0
    %v340 = vxor.u32 %v165, 2147483648
    %v341 = vxor.u32 %v170, 2147483648
    %v342 = vmul.f32 %v340, 1.442695
    %v343 = vpow.pop %v342
    %v344 = vmul.f32 %v341, 1.442695
    %v345 = vpow.pop %v344
    %v346 = vadd.f32 %v343, 1.0
    %v347 = vadd.f32 %v345, 1.0
    %v348 = vrcp.pop %v346
    %v349 = vmul.f32 1.0, %v348
    %v350 = vrcp.pop %v347
    %v351 = vmul.f32 1.0, %v350
    %354 = vrot.lane.b32.xlu0 %v349, 96
    %v355 = vpop.permute.xlu0 %354
    %356 = vrot.lane.b32.xlu0 %v351, 96
    %v357 = vpop.permute.xlu0 %356
    %v360 = vmul.f32 %v332, %v355
    %v361 = vmul.f32 %v337, %v357
    %v362 = vld [vmem:[%s7] sm:$0xff]
    %v363 = vld [vmem:[%s7 + $0x8] sm:$0xff]
    %v364 = vld [vmem:[%s7 + $0x10] sm:$0xff]
    %v365 = vld [vmem:[%s7 + $0x18] sm:$0xff]
    %v366 = vld [vmem:[%s8] sm:$0x1]
    %v368 = vlaneseq
    %v369 = vshrl.u32 %v368, 7
    %v370 = vsub.s32 0, %v369
    %v371 = vrot.slane %v366, %v370
    %v374 = vsel %vm35, %v360, 0
    %v377 = vsel %vm35, %v361, 0
    %379 = vmatprep.subr.mxu0 0.0
    %380 = vmatpush1.msra.mxu0 %v362
    %381 = vmatprep.subr.mxu0 0.0
    %382 = vmatpush1.msra.mxu0 %v363
    %383 = vmatprep.subr.mxu0 0.0
    %384 = vmatpush1.msra.mxu0 %v364
    %385 = vmatprep.subr.mxu0 0.0
    %386 = vmatpush1.msra.mxu0 %v365
    %387 = vmatprep.subr.mxu0 0.0
    %388 = vmatpush1.msra.mxu0 0.0
    %389 = vmatprep.subr.mxu0 0.0
    %390 = vmatpush1.msra.mxu0 0.0
    %391 = vmatprep.subr.mxu0 0.0
    %392 = vmatpush1.msra.mxu0 0.0
    %393 = vmatprep.subr.mxu0 0.0
    %394 = vmatpush1.msra.mxu0 0.0
    %395 = vmatprep.subr.mxu0 0.0
    %396 = vmatpush1.msra.mxu0 0.0
    %397 = vmatprep.subr.mxu0 0.0
    %398 = vmatpush1.msra.mxu0 0.0
    %399 = vmatprep.subr.mxu0 0.0
    %400 = vmatpush1.msra.mxu0 0.0
    %401 = vmatprep.subr.mxu0 0.0
    %402 = vmatpush1.msra.mxu0 0.0
    %403 = vmatprep.subr.mxu0 0.0
    %404 = vmatpush1.msra.mxu0 0.0
    %405 = vmatprep.subr.mxu0 0.0
    %406 = vmatpush1.msra.mxu0 0.0
    %407 = vmatprep.subr.mxu0 0.0
    %408 = vmatpush1.msra.mxu0 0.0
    %409 = vmatprep.subr.mxu0 0.0
    %410 = vmatpush1.msra.mxu0 0.0
    %411 = vmatprep.subr.mxu0 0.0
    %412 = vmatpush1.msra.mxu0 0.0
    %413 = vmatprep.subr.mxu0 0.0
    %414 = vmatpush1.msra.mxu0 0.0
    %415 = vmatprep.subr.mxu0 0.0
    %416 = vmatpush1.msra.mxu0 0.0
    %417 = vmatprep.subr.mxu0 0.0
    %418 = vmatpush1.msra.mxu0 0.0
    %419 = vmatprep.subr.mxu0 0.0
    %420 = vmatpush1.msra.mxu0 0.0
    %421 = vmatprep.subr.mxu0 0.0
    %422 = vmatpush1.msra.mxu0 0.0
    %423 = vmatprep.subr.mxu0 0.0
    %424 = vmatpush1.msra.mxu0 0.0
    %425 = vmatprep.subr.mxu0 0.0
    %426 = vmatpush1.msra.mxu0 0.0
    %427 = vmatprep.subr.mxu0 0.0
    %428 = vmatpush1.msra.mxu0 0.0
    %429 = vmatprep.subr.mxu0 0.0
    %430 = vmatpush1.msra.mxu0 0.0
    %431 = vmatprep.subr.mxu0 0.0
    %432 = vmatpush1.msra.mxu0 0.0
    %433 = vmatprep.subr.mxu0 0.0
    %434 = vmatpush1.msra.mxu0 0.0
    %435 = vmatprep.subr.mxu0 0.0
    %436 = vmatpush1.msra.mxu0 0.0
    %437 = vmatprep.subr.mxu0 0.0
    %438 = vmatpush1.msra.mxu0 0.0
    %439 = vmatprep.subr.mxu0 0.0
    %440 = vmatpush1.msra.mxu0 0.0
    %441 = vmatprep.subr.mxu0 0.0
    %442 = vmatpush1.msra.mxu0 0.0
    %443 = vmatprep.mubr.f32.mxu0 0.0
    %444 = vmatmul.mubr.f32.gmra.mrb[0].mxu0 %v374
    %v445 = vpop.f32.mrb[0].mxu0
    %v446 = vadd.f32 %v371, %v445
    %v447 = vpop.f32.mrb[0].mxu0
    %448 = vmatprep.mubr.f32.mxu0 0.0
    %449 = vmatmul.mubr.f32.gmra.mrb[0].mxu0 %v377
    %v450 = vpop.f32.mrb[0].mxu0
    %v451 = vadd.f32 %v371, %v450
    %v452 = vpop.f32.mrb[0].mxu0
    %453 = vdwg.mxu0
    %v454 = vadd.f32 %v446, %v33
    %v455 = vadd.f32 %v451, %v34
    %456 = vst.msk [vmem:[#allocation2] sm:$0xff] %vm35, %v454
    %457 = vst.msk [vmem:[#allocation2 + $0x8] sm:$0xff] %vm35, %v455
    // Predicated region
    $region38: #{tpu_custom_call.1} parent=1 // pred_check
      _
    $region39: #{tpu_custom_call.1} parent=1 // pred_check_branch
      %459 = sbr.rel (0) target = $region41
    $region40: #{tpu_custom_call.1} parent=1 // pred_region
      %s461 = ssub.s32 256, 256
      %462 = vsyncadd [#allocation3], %s461
      %s463 = sshll.u32 [#allocation2], 4
      %s464 = int_to_ptr.vmem [resolvable:$true] %s463
      %469 = dma.vmem_to_hbm [thread:$0]  %s464, 256, %s9, [#allocation3], 128, 128, 8
    $region41: #{tpu_custom_call.1} parent=1 // pred_fallthru
      _
    // Predicated region
    $region42: #{tpu_custom_call.1} parent=1 // pred_check
      _
    $region43: #{tpu_custom_call.1} parent=1 // pred_check_branch
      %471 = sbr.rel (0) target = $region45
    $region44: #{tpu_custom_call.1} parent=1 // pred_region
      %472 = dma.done [#allocation3], 256
    $region45: #{tpu_custom_call.1} parent=1 // pred_fallthru
      _
    %473 = vsyncpa [#allocation3], 1

</llo_original>
